<compile_context>
chip_gen: v5e
topology: v5e:2x2
jax: 0.10.0
libtpu: 0.0.40
codegen_flags: <defaults>
</compile_context>

<pallas_src>
import functools
import math

import jax
import jax.numpy as jnp
from jax.experimental import pallas as pl
from jax.experimental.pallas import tpu as pltpu

LEAKY_SLOPE = 0.2


def _alpha_mix_kernel(alpha_ref, x1_ref, x2_ref, w_ref, b_ref, s_ref, o_ref,
                      *, rows, in_w, out_w, mm_dtype):
    """One (batch, row-tile) grid step.

    x1_ref : [1, Cin, rows * 2 * in_w]  raw NCHW pixels, one row-pair per chunk
    x2_ref : [1, Cout, rows * out_w]
    w_ref  : [Cout, Cin]                1x1-conv weight
    b_ref  : [Cout, 1]                  bias (f32)
    s_ref  : [in_w, out_w]              column-pair pooling matrix (0.25 entries)
    o_ref  : [1, Cout, rows * out_w]
    """
    alpha = alpha_ref[0]                       # f32 scalar from SMEM
    one_minus_alpha = 1.0 - alpha              # hoisted out of the per-row blend
    w = w_ref[...]
    b = b_ref[...]                             # [Cout, 1] broadcasts across lanes
    s = s_ref[...]
    chunk = 2 * in_w                           # two input rows per output row

    for r in range(rows):                      # static unroll (rows is capped)
        # conv1x1 on both input rows of this output row (single MXU dot)
        xr = x1_ref[0, :, r * chunk:(r + 1) * chunk].astype(mm_dtype)   # [Cin, 2W]
        y = jnp.dot(w, xr, preferred_element_type=jnp.float32) + b      # [Cout, 2W]
        y = jnp.maximum(y, LEAKY_SLOPE * y)            # LeakyReLU(0.2), pre-pool
        # 2x2 average pool:
        #   row-pair sum with contiguous value slices (lanes [0,W) / [W,2W)),
        #   column-pair sum + compaction + 1/4 scale as one small matmul.
        ysum = y[:, :in_w] + y[:, in_w:]                                # [Cout, W]
        pooled = jnp.dot(ysum.astype(mm_dtype), s,
                         preferred_element_type=jnp.float32)            # [Cout, Wo]
        # alpha blend and store into the lane-dense output block
        x2r = x2_ref[0, :, r * out_w:(r + 1) * out_w].astype(jnp.float32)
        o_ref[0, :, r * out_w:(r + 1) * out_w] = (
            one_minus_alpha * x2r + alpha * pooled).astype(o_ref.dtype)


def _vmem_limit_bytes():
    """Per-generation VMEM limit: large on v5e/v6e (128 MiB), safe on v7x (64 MiB)."""
    try:
        cap = int(pltpu.get_tpu_info().vmem_capacity_bytes)
    except Exception:  # unknown chip / API: fall back to the v7x-safe value
        cap = 64 << 20
    return max(32 << 20, min(cap - (16 << 20), 96 << 20))


def _rows_per_block(n, ho, wo, per_row_bytes, *,
                    byte_target=4 << 20, vmem_budget=24 << 20, max_rows=64):
    """Output rows per grid step: byte-budgeted, 128-lane aligned, VMEM-capped."""
    step = 128 // math.gcd(wo, 128)        # smallest R with (R * wo) % 128 == 0
    if step >= ho:
        return ho                          # whole sample: full-dim block, always legal
    r_vmem = max(1, vmem_budget // (3 * per_row_bytes))
    r_target = max(1, byte_target // per_row_bytes)
    r_cap = min(ho, r_vmem, max_rows)
    if n == 1:                             # keep >=2 blocks for v7x's two TensorCores
        r_cap = min(r_cap, max(step, -(-ho // 2)))
    r = min(r_cap, max(r_target, step))
    r = max(step, (r // step) * step)      # align down to the 128-lane granule
    if ho % r:                             # prefer a nearby divisor (tail-free grid)
        for cand in range(r, max(step, r // 2) - 1, -step):
            if ho % cand == 0:
                return cand
    return r                               # pl.cdiv pads the last block otherwise


def alpha_mix_with_progression(x1, x2, w, b, alpha, *, compute_dtype=None):
    """x1: [N,Cin,H,W], x2: [N,Cout,H//2,W//2], w: [Cout,Cin], b: [Cout] -> NCHW out."""
    n, cin, h, wdim = x1.shape
    cout = w.shape[0]
    ho, wo = h // 2, wdim // 2
    assert x2.shape == (n, cout, ho, wo)
    if (h % 2) or (wdim % 2):              # PyTorch AvgPool2d(2) floors odd H/W
        x1 = x1[:, :, : 2 * ho, : 2 * wo]
    in_w = 2 * wo                          # (cropped) input width
    p_out = ho * wo
    p_in = 2 * ho * in_w

    mm_dtype = jnp.dtype(compute_dtype) if compute_dtype is not None else jnp.dtype(x1.dtype)

    # Free views only (no transpose / gather prepass, no extra HBM pass over x1).
    x1_flat = x1.reshape(n, cin, p_in)
    x2_flat = x2.reshape(n, cout, p_out)

    x1_item = jnp.dtype(x1.dtype).itemsize
    x2_item = jnp.dtype(x2.dtype).itemsize
    per_row_bytes = wo * (4 * cin * x1_item + 2 * cout * x2_item)
    rows = _rows_per_block(n, ho, wo, per_row_bytes)
    t_in = rows * 2 * in_w                 # x1 lanes per block (= 4 * t_out)
    t_out = rows * wo                      # x2 / out lanes per block
    n_tiles = pl.cdiv(ho, rows)

    # Column-pair pooling matrix: s[k, q] = 0.25 iff k // 2 == q  (0.25 exact in bf16).
    s = jnp.where(
        (jnp.arange(in_w)[:, None] // 2) == jnp.arange(wo)[None, :], 0.25, 0.0
    ).astype(mm_dtype)

    w2 = w.astype(mm_dtype)
    b2 = b.reshape(cout, 1).astype(jnp.float32)
    alpha_arr = jnp.full((1,), alpha, dtype=jnp.float32)

    kernel = functools.partial(_alpha_mix_kernel, rows=rows, in_w=in_w,
                               out_w=wo, mm_dtype=mm_dtype)

    out_flat = pl.pallas_call(
        kernel,
        out_shape=jax.ShapeDtypeStruct((n, cout, p_out), x2.dtype),
        grid_spec=pltpu.PrefetchScalarGridSpec(
            num_scalar_prefetch=0,
            grid=(n, n_tiles),
            in_specs=[
                pl.BlockSpec(memory_space=pltpu.MemorySpace.SMEM),       # alpha
                pl.BlockSpec((1, cin, t_in), lambda i, j: (i, 0, j)),    # x1 (raw NCHW)
                pl.BlockSpec((1, cout, t_out), lambda i, j: (i, 0, j)),  # x2
                pl.BlockSpec((cout, cin), lambda i, j: (0, 0)),          # conv weight
                pl.BlockSpec((cout, 1), lambda i, j: (0, 0)),            # bias
                pl.BlockSpec((in_w, wo), lambda i, j: (0, 0)),           # pool matrix
            ],
            out_specs=pl.BlockSpec((1, cout, t_out), lambda i, j: (i, 0, j)),
        ),
        compiler_params=pltpu.CompilerParams(
            dimension_semantics=("parallel", "parallel"),
            vmem_limit_bytes=_vmem_limit_bytes(),
        ),
    )(alpha_arr, x1_flat, x2_flat, w2, b2, s)

    return out_flat.reshape(n, cout, ho, wo)


def _reference(x1, x2, w, b, alpha):
    # Pure-JAX reference of the same forward pass (NCHW in/out, f32).
    n, cin, h, wdim = x1.shape
    ho, wo = h // 2, wdim // 2
    x1 = x1[:, :, : 2 * ho, : 2 * wo]
    y = jnp.einsum("nchw,dc->ndhw", x1, w) + b[None, :, None, None]
    y = jnp.where(y > 0, y, LEAKY_SLOPE * y)
    y = y.reshape(n, -1, ho, 2, wo, 2).mean(axis=(3, 5))
    return (1.0 - alpha) * x2 + alpha * y


if __name__ == "__main__":
    key = jax.random.PRNGKey(0)
    k1, k2, k3, k4, k5, k6, k7, k8 = jax.random.split(key, 8)

    # --- config 1: small shape (single whole-sample tile per grid step) ---
    N, Cin, H, W = 2, 4, 16, 16
    Cout = 8
    alpha = 0.3
    x1 = jax.random.normal(k1, (N, Cin, H, W), dtype=jnp.float32)
    x2 = jax.random.normal(k2, (N, Cout, H // 2, W // 2), dtype=jnp.float32)
    w = jax.random.normal(k3, (Cout, Cin), dtype=jnp.float32) * 0.1
    b = jax.random.normal(k4, (Cout,), dtype=jnp.float32) * 0.1

    ref = _reference(x1, x2, w, b, alpha)
    out = jax.block_until_ready(alpha_mix_with_progression(x1, x2, w, b, alpha))
    assert out.shape == (N, Cout, H // 2, W // 2)
    assert jnp.allclose(out, ref, atol=1e-4, rtol=1e-4)

    # bf16 matmul-operand path (cast happens in-kernel; looser tolerance)
    out_bf16 = jax.block_until_ready(
        alpha_mix_with_progression(x1, x2, w, b, alpha, compute_dtype=jnp.bfloat16)
    )
    assert jnp.allclose(out_bf16, ref, atol=5e-2, rtol=5e-2)

    # --- config 2: larger shape exercising the multi-row-tile grid path ---
    N2, Cin2, H2, W2 = 1, 8, 64, 64
    Cout2 = 16
    alpha2 = 0.7
    x1b = jax.random.normal(k5, (N2, Cin2, H2, W2), dtype=jnp.float32)
    x2b = jax.random.normal(k6, (N2, Cout2, H2 // 2, W2 // 2), dtype=jnp.float32)
    wb = jax.random.normal(k7, (Cout2, Cin2), dtype=jnp.float32) * 0.1
    bb = jax.random.normal(k8, (Cout2,), dtype=jnp.float32) * 0.1

    refb = _reference(x1b, x2b, wb, bb, alpha2)
    outb = jax.block_until_ready(alpha_mix_with_progression(x1b, x2b, wb, bb, alpha2))
    assert outb.shape == (N2, Cout2, H2 // 2, W2 // 2)
    assert jnp.allclose(outb, refb, atol=1e-4, rtol=1e-4)

    print("KERNEL_OK")
</pallas_src>

<mosaic_0001>
module attributes {stable_mosaic.version = 11 : i64} {
  func.func @_alpha_mix_kernel(%arg0: i32, %arg1: i32, %arg2: memref<1xf32, #tpu.memory_space<smem>>, %arg3: memref<1x4x256xf32, #tpu.memory_space<vmem>>, %arg4: memref<1x8x64xf32, #tpu.memory_space<vmem>>, %arg5: memref<8x4xf32, #tpu.memory_space<vmem>>, %arg6: memref<8x1xf32, #tpu.memory_space<vmem>>, %arg7: memref<16x8xf32, #tpu.memory_space<vmem>>, %arg8: memref<1x8x64xf32, #tpu.memory_space<vmem>>) attributes {dimension_semantics = [#tpu.dimension_semantics<parallel>, #tpu.dimension_semantics<parallel>], iteration_bounds = array<i64: 2, 1>, scalar_prefetch = 0 : i64, scratch_operands = 0 : i64, tpu.core_type = #tpu.core_type<tc>, window_params = [{transform_indices = @transform_0, window_bounds = array<i64: 1>}, {transform_indices = @transform_1, window_bounds = array<i64: 1, 4, 256>}, {transform_indices = @transform_2, window_bounds = array<i64: 1, 8, 64>}, {pipeline_mode = #tpu.pipeline_mode<synchronous>, transform_indices = @transform_3, window_bounds = array<i64: 8, 4>}, {pipeline_mode = #tpu.pipeline_mode<synchronous>, transform_indices = @transform_4, window_bounds = array<i64: 8, 1>}, {pipeline_mode = #tpu.pipeline_mode<synchronous>, transform_indices = @transform_5, window_bounds = array<i64: 16, 8>}, {transform_indices = @transform_6, window_bounds = array<i64: 1, 8, 64>}]} {
    %c0 = arith.constant 0 : index
    %0 = memref.load %arg2[%c0] : memref<1xf32, #tpu.memory_space<smem>>
    %cst = arith.constant 1.000000e+00 : f32
    %1 = arith.subf %cst, %0 : f32
    %c0_0 = arith.constant 0 : index
    %c0_1 = arith.constant 0 : index
    %2 = vector.load %arg5[%c0_0, %c0_1] : memref<8x4xf32, #tpu.memory_space<vmem>>, vector<8x4xf32>
    %c0_2 = arith.constant 0 : index
    %c0_3 = arith.constant 0 : index
    %3 = vector.load %arg6[%c0_2, %c0_3] : memref<8x1xf32, #tpu.memory_space<vmem>>, vector<8x1xf32>
    %c0_4 = arith.constant 0 : index
    %c0_5 = arith.constant 0 : index
    %4 = vector.load %arg7[%c0_4, %c0_5] : memref<16x8xf32, #tpu.memory_space<vmem>>, vector<16x8xf32>
    %c0_6 = arith.constant 0 : index
    %c0_7 = arith.constant 0 : index
    %c0_8 = arith.constant 0 : index
    %5 = vector.load %arg3[%c0_6, %c0_7, %c0_8] : memref<1x4x256xf32, #tpu.memory_space<vmem>>, vector<1x4x32xf32>
    %6 = vector.shape_cast %5 : vector<1x4x32xf32> to vector<4x32xf32>
    %cst_9 = arith.constant dense<0.000000e+00> : vector<8x32xf32>
    %7 = tpu.matmul %2, %6, %cst_9 {dimension_numbers = #tpu.dot_dimension_numbers<[1], [0], [0], [1], [0, 0, 1, 1], [], []>} : vector<8x4xf32>, vector<4x32xf32>, vector<8x32xf32> -> vector<8x32xf32>
    %8 = vector.broadcast %3 : vector<8x1xf32> to vector<8x32xf32>
    %9 = arith.addf %7, %8 : vector<8x32xf32>
    %cst_10 = arith.constant 2.000000e-01 : f32
    %10 = vector.broadcast %cst_10 : f32 to vector<8x32xf32>
    %11 = arith.mulf %10, %9 : vector<8x32xf32>
    %12 = arith.maximumf %9, %11 : vector<8x32xf32>
    %13 = vector.extract_strided_slice %12 {offsets = [0, 0], sizes = [8, 16], strides = [1, 1]} : vector<8x32xf32> to vector<8x16xf32>
    %14 = vector.extract_strided_slice %12 {offsets = [0, 16], sizes = [8, 16], strides = [1, 1]} : vector<8x32xf32> to vector<8x16xf32>
    %15 = arith.addf %13, %14 : vector<8x16xf32>
    %cst_11 = arith.constant dense<0.000000e+00> : vector<8x8xf32>
    %16 = tpu.matmul %15, %4, %cst_11 {dimension_numbers = #tpu.dot_dimension_numbers<[1], [0], [0], [1], [0, 0, 1, 1], [], []>} : vector<8x16xf32>, vector<16x8xf32>, vector<8x8xf32> -> vector<8x8xf32>
    %c0_12 = arith.constant 0 : index
    %c0_13 = arith.constant 0 : index
    %c0_14 = arith.constant 0 : index
    %17 = vector.load %arg4[%c0_12, %c0_13, %c0_14] : memref<1x8x64xf32, #tpu.memory_space<vmem>>, vector<1x8x8xf32>
    %18 = vector.shape_cast %17 : vector<1x8x8xf32> to vector<8x8xf32>
    %19 = vector.broadcast %1 : f32 to vector<8x8xf32>
    %20 = arith.mulf %19, %18 : vector<8x8xf32>
    %21 = vector.broadcast %0 : f32 to vector<8x8xf32>
    %22 = arith.mulf %21, %16 : vector<8x8xf32>
    %23 = arith.addf %20, %22 : vector<8x8xf32>
    %c0_15 = arith.constant 0 : index
    %c0_16 = arith.constant 0 : index
    %c0_17 = arith.constant 0 : index
    %24 = vector.load %arg8[%c0_15, %c0_16, %c0_17] : memref<1x8x64xf32, #tpu.memory_space<vmem>>, vector<1x8x8xf32>
    %25 = vector.shape_cast %24 : vector<1x8x8xf32> to vector<8x8xf32>
    %26 = vector.shape_cast %23 : vector<8x8xf32> to vector<1x8x8xf32>
    tpu.vector_store %arg8[%c0_15, %c0_16, %c0_17], %26 {strides = array<i32>} : memref<1x8x64xf32, #tpu.memory_space<vmem>>, vector<1x8x8xf32>,
    %c0_18 = arith.constant 0 : index
    %c0_19 = arith.constant 0 : index
    %c32 = arith.constant 32 : index
    %27 = vector.load %arg3[%c0_18, %c0_19, %c32] : memref<1x4x256xf32, #tpu.memory_space<vmem>>, vector<1x4x32xf32>
    %28 = vector.shape_cast %27 : vector<1x4x32xf32> to vector<4x32xf32>
    %cst_20 = arith.constant dense<0.000000e+00> : vector<8x32xf32>
    %29 = tpu.matmul %2, %28, %cst_20 {dimension_numbers = #tpu.dot_dimension_numbers<[1], [0], [0], [1], [0, 0, 1, 1], [], []>} : vector<8x4xf32>, vector<4x32xf32>, vector<8x32xf32> -> vector<8x32xf32>
    %30 = vector.broadcast %3 : vector<8x1xf32> to vector<8x32xf32>
    %31 = arith.addf %29, %30 : vector<8x32xf32>
    %cst_21 = arith.constant 2.000000e-01 : f32
    %32 = vector.broadcast %cst_21 : f32 to vector<8x32xf32>
    %33 = arith.mulf %32, %31 : vector<8x32xf32>
    %34 = arith.maximumf %31, %33 : vector<8x32xf32>
    %35 = vector.extract_strided_slice %34 {offsets = [0, 0], sizes = [8, 16], strides = [1, 1]} : vector<8x32xf32> to vector<8x16xf32>
    %36 = vector.extract_strided_slice %34 {offsets = [0, 16], sizes = [8, 16], strides = [1, 1]} : vector<8x32xf32> to vector<8x16xf32>
    %37 = arith.addf %35, %36 : vector<8x16xf32>
    %cst_22 = arith.constant dense<0.000000e+00> : vector<8x8xf32>
    %38 = tpu.matmul %37, %4, %cst_22 {dimension_numbers = #tpu.dot_dimension_numbers<[1], [0], [0], [1], [0, 0, 1, 1], [], []>} : vector<8x16xf32>, vector<16x8xf32>, vector<8x8xf32> -> vector<8x8xf32>
    %c0_23 = arith.constant 0 : index
    %c0_24 = arith.constant 0 : index
    %c8 = arith.constant 8 : index
    %39 = vector.load %arg4[%c0_23, %c0_24, %c8] : memref<1x8x64xf32, #tpu.memory_space<vmem>>, vector<1x8x8xf32>
    %40 = vector.shape_cast %39 : vector<1x8x8xf32> to vector<8x8xf32>
    %41 = vector.broadcast %1 : f32 to vector<8x8xf32>
    %42 = arith.mulf %41, %40 : vector<8x8xf32>
    %43 = vector.broadcast %0 : f32 to vector<8x8xf32>
    %44 = arith.mulf %43, %38 : vector<8x8xf32>
    %45 = arith.addf %42, %44 : vector<8x8xf32>
    %c0_25 = arith.constant 0 : index
    %c0_26 = arith.constant 0 : index
    %c8_27 = arith.constant 8 : index
    %46 = vector.load %arg8[%c0_25, %c0_26, %c8_27] : memref<1x8x64xf32, #tpu.memory_space<vmem>>, vector<1x8x8xf32>
    %47 = vector.shape_cast %46 : vector<1x8x8xf32> to vector<8x8xf32>
    %48 = vector.shape_cast %45 : vector<8x8xf32> to vector<1x8x8xf32>
    tpu.vector_store %arg8[%c0_25, %c0_26, %c8_27], %48 {strides = array<i32>} : memref<1x8x64xf32, #tpu.memory_space<vmem>>, vector<1x8x8xf32>,
    %c0_28 = arith.constant 0 : index
    %c0_29 = arith.constant 0 : index
    %c64 = arith.constant 64 : index
    %49 = vector.load %arg3[%c0_28, %c0_29, %c64] : memref<1x4x256xf32, #tpu.memory_space<vmem>>, vector<1x4x32xf32>
    %50 = vector.shape_cast %49 : vector<1x4x32xf32> to vector<4x32xf32>
    %cst_30 = arith.constant dense<0.000000e+00> : vector<8x32xf32>
    %51 = tpu.matmul %2, %50, %cst_30 {dimension_numbers = #tpu.dot_dimension_numbers<[1], [0], [0], [1], [0, 0, 1, 1], [], []>} : vector<8x4xf32>, vector<4x32xf32>, vector<8x32xf32> -> vector<8x32xf32>
    %52 = vector.broadcast %3 : vector<8x1xf32> to vector<8x32xf32>
    %53 = arith.addf %51, %52 : vector<8x32xf32>
    %cst_31 = arith.constant 2.000000e-01 : f32
    %54 = vector.broadcast %cst_31 : f32 to vector<8x32xf32>
    %55 = arith.mulf %54, %53 : vector<8x32xf32>
    %56 = arith.maximumf %53, %55 : vector<8x32xf32>
    %57 = vector.extract_strided_slice %56 {offsets = [0, 0], sizes = [8, 16], strides = [1, 1]} : vector<8x32xf32> to vector<8x16xf32>
    %58 = vector.extract_strided_slice %56 {offsets = [0, 16], sizes = [8, 16], strides = [1, 1]} : vector<8x32xf32> to vector<8x16xf32>
    %59 = arith.addf %57, %58 : vector<8x16xf32>
    %cst_32 = arith.constant dense<0.000000e+00> : vector<8x8xf32>
    %60 = tpu.matmul %59, %4, %cst_32 {dimension_numbers = #tpu.dot_dimension_numbers<[1], [0], [0], [1], [0, 0, 1, 1], [], []>} : vector<8x16xf32>, vector<16x8xf32>, vector<8x8xf32> -> vector<8x8xf32>
    %c0_33 = arith.constant 0 : index
    %c0_34 = arith.constant 0 : index
    %c16 = arith.constant 16 : index
    %61 = vector.load %arg4[%c0_33, %c0_34, %c16] : memref<1x8x64xf32, #tpu.memory_space<vmem>>, vector<1x8x8xf32>
    %62 = vector.shape_cast %61 : vector<1x8x8xf32> to vector<8x8xf32>
    %63 = vector.broadcast %1 : f32 to vector<8x8xf32>
    %64 = arith.mulf %63, %62 : vector<8x8xf32>
    %65 = vector.broadcast %0 : f32 to vector<8x8xf32>
    %66 = arith.mulf %65, %60 : vector<8x8xf32>
    %67 = arith.addf %64, %66 : vector<8x8xf32>
    %c0_35 = arith.constant 0 : index
    %c0_36 = arith.constant 0 : index
    %c16_37 = arith.constant 16 : index
    %68 = vector.load %arg8[%c0_35, %c0_36, %c16_37] : memref<1x8x64xf32, #tpu.memory_space<vmem>>, vector<1x8x8xf32>
    %69 = vector.shape_cast %68 : vector<1x8x8xf32> to vector<8x8xf32>
    %70 = vector.shape_cast %67 : vector<8x8xf32> to vector<1x8x8xf32>
    tpu.vector_store %arg8[%c0_35, %c0_36, %c16_37], %70 {strides = array<i32>} : memref<1x8x64xf32, #tpu.memory_space<vmem>>, vector<1x8x8xf32>,
    %c0_38 = arith.constant 0 : index
    %c0_39 = arith.constant 0 : index
    %c96 = arith.constant 96 : index
    %71 = vector.load %arg3[%c0_38, %c0_39, %c96] : memref<1x4x256xf32, #tpu.memory_space<vmem>>, vector<1x4x32xf32>
    %72 = vector.shape_cast %71 : vector<1x4x32xf32> to vector<4x32xf32>
    %cst_40 = arith.constant dense<0.000000e+00> : vector<8x32xf32>
    %73 = tpu.matmul %2, %72, %cst_40 {dimension_numbers = #tpu.dot_dimension_numbers<[1], [0], [0], [1], [0, 0, 1, 1], [], []>} : vector<8x4xf32>, vector<4x32xf32>, vector<8x32xf32> -> vector<8x32xf32>
    %74 = vector.broadcast %3 : vector<8x1xf32> to vector<8x32xf32>
    %75 = arith.addf %73, %74 : vector<8x32xf32>
    %cst_41 = arith.constant 2.000000e-01 : f32
    %76 = vector.broadcast %cst_41 : f32 to vector<8x32xf32>
    %77 = arith.mulf %76, %75 : vector<8x32xf32>
    %78 = arith.maximumf %75, %77 : vector<8x32xf32>
    %79 = vector.extract_strided_slice %78 {offsets = [0, 0], sizes = [8, 16], strides = [1, 1]} : vector<8x32xf32> to vector<8x16xf32>
    %80 = vector.extract_strided_slice %78 {offsets = [0, 16], sizes = [8, 16], strides = [1, 1]} : vector<8x32xf32> to vector<8x16xf32>
    %81 = arith.addf %79, %80 : vector<8x16xf32>
    %cst_42 = arith.constant dense<0.000000e+00> : vector<8x8xf32>
    %82 = tpu.matmul %81, %4, %cst_42 {dimension_numbers = #tpu.dot_dimension_numbers<[1], [0], [0], [1], [0, 0, 1, 1], [], []>} : vector<8x16xf32>, vector<16x8xf32>, vector<8x8xf32> -> vector<8x8xf32>
    %c0_43 = arith.constant 0 : index
    %c0_44 = arith.constant 0 : index
    %c24 = arith.constant 24 : index
    %83 = vector.load %arg4[%c0_43, %c0_44, %c24] : memref<1x8x64xf32, #tpu.memory_space<vmem>>, vector<1x8x8xf32>
    %84 = vector.shape_cast %83 : vector<1x8x8xf32> to vector<8x8xf32>
    %85 = vector.broadcast %1 : f32 to vector<8x8xf32>
    %86 = arith.mulf %85, %84 : vector<8x8xf32>
    %87 = vector.broadcast %0 : f32 to vector<8x8xf32>
    %88 = arith.mulf %87, %82 : vector<8x8xf32>
    %89 = arith.addf %86, %88 : vector<8x8xf32>
    %c0_45 = arith.constant 0 : index
    %c0_46 = arith.constant 0 : index
    %c24_47 = arith.constant 24 : index
    %90 = vector.load %arg8[%c0_45, %c0_46, %c24_47] : memref<1x8x64xf32, #tpu.memory_space<vmem>>, vector<1x8x8xf32>
    %91 = vector.shape_cast %90 : vector<1x8x8xf32> to vector<8x8xf32>
    %92 = vector.shape_cast %89 : vector<8x8xf32> to vector<1x8x8xf32>
    tpu.vector_store %arg8[%c0_45, %c0_46, %c24_47], %92 {strides = array<i32>} : memref<1x8x64xf32, #tpu.memory_space<vmem>>, vector<1x8x8xf32>,
    %c0_48 = arith.constant 0 : index
    %c0_49 = arith.constant 0 : index
    %c128 = arith.constant 128 : index
    %93 = vector.load %arg3[%c0_48, %c0_49, %c128] : memref<1x4x256xf32, #tpu.memory_space<vmem>>, vector<1x4x32xf32>
    %94 = vector.shape_cast %93 : vector<1x4x32xf32> to vector<4x32xf32>
    %cst_50 = arith.constant dense<0.000000e+00> : vector<8x32xf32>
    %95 = tpu.matmul %2, %94, %cst_50 {dimension_numbers = #tpu.dot_dimension_numbers<[1], [0], [0], [1], [0, 0, 1, 1], [], []>} : vector<8x4xf32>, vector<4x32xf32>, vector<8x32xf32> -> vector<8x32xf32>
    %96 = vector.broadcast %3 : vector<8x1xf32> to vector<8x32xf32>
    %97 = arith.addf %95, %96 : vector<8x32xf32>
    %cst_51 = arith.constant 2.000000e-01 : f32
    %98 = vector.broadcast %cst_51 : f32 to vector<8x32xf32>
    %99 = arith.mulf %98, %97 : vector<8x32xf32>
    %100 = arith.maximumf %97, %99 : vector<8x32xf32>
    %101 = vector.extract_strided_slice %100 {offsets = [0, 0], sizes = [8, 16], strides = [1, 1]} : vector<8x32xf32> to vector<8x16xf32>
    %102 = vector.extract_strided_slice %100 {offsets = [0, 16], sizes = [8, 16], strides = [1, 1]} : vector<8x32xf32> to vector<8x16xf32>
    %103 = arith.addf %101, %102 : vector<8x16xf32>
    %cst_52 = arith.constant dense<0.000000e+00> : vector<8x8xf32>
    %104 = tpu.matmul %103, %4, %cst_52 {dimension_numbers = #tpu.dot_dimension_numbers<[1], [0], [0], [1], [0, 0, 1, 1], [], []>} : vector<8x16xf32>, vector<16x8xf32>, vector<8x8xf32> -> vector<8x8xf32>
    %c0_53 = arith.constant 0 : index
    %c0_54 = arith.constant 0 : index
    %c32_55 = arith.constant 32 : index
    %105 = vector.load %arg4[%c0_53, %c0_54, %c32_55] : memref<1x8x64xf32, #tpu.memory_space<vmem>>, vector<1x8x8xf32>
    %106 = vector.shape_cast %105 : vector<1x8x8xf32> to vector<8x8xf32>
    %107 = vector.broadcast %1 : f32 to vector<8x8xf32>
    %108 = arith.mulf %107, %106 : vector<8x8xf32>
    %109 = vector.broadcast %0 : f32 to vector<8x8xf32>
    %110 = arith.mulf %109, %104 : vector<8x8xf32>
    %111 = arith.addf %108, %110 : vector<8x8xf32>
    %c0_56 = arith.constant 0 : index
    %c0_57 = arith.constant 0 : index
    %c32_58 = arith.constant 32 : index
    %112 = vector.load %arg8[%c0_56, %c0_57, %c32_58] : memref<1x8x64xf32, #tpu.memory_space<vmem>>, vector<1x8x8xf32>
    %113 = vector.shape_cast %112 : vector<1x8x8xf32> to vector<8x8xf32>
    %114 = vector.shape_cast %111 : vector<8x8xf32> to vector<1x8x8xf32>
    tpu.vector_store %arg8[%c0_56, %c0_57, %c32_58], %114 {strides = array<i32>} : memref<1x8x64xf32, #tpu.memory_space<vmem>>, vector<1x8x8xf32>,
    %c0_59 = arith.constant 0 : index
    %c0_60 = arith.constant 0 : index
    %c160 = arith.constant 160 : index
    %115 = vector.load %arg3[%c0_59, %c0_60, %c160] : memref<1x4x256xf32, #tpu.memory_space<vmem>>, vector<1x4x32xf32>
    %116 = vector.shape_cast %115 : vector<1x4x32xf32> to vector<4x32xf32>
    %cst_61 = arith.constant dense<0.000000e+00> : vector<8x32xf32>
    %117 = tpu.matmul %2, %116, %cst_61 {dimension_numbers = #tpu.dot_dimension_numbers<[1], [0], [0], [1], [0, 0, 1, 1], [], []>} : vector<8x4xf32>, vector<4x32xf32>, vector<8x32xf32> -> vector<8x32xf32>
    %118 = vector.broadcast %3 : vector<8x1xf32> to vector<8x32xf32>
    %119 = arith.addf %117, %118 : vector<8x32xf32>
    %cst_62 = arith.constant 2.000000e-01 : f32
    %120 = vector.broadcast %cst_62 : f32 to vector<8x32xf32>
    %121 = arith.mulf %120, %119 : vector<8x32xf32>
    %122 = arith.maximumf %119, %121 : vector<8x32xf32>
    %123 = vector.extract_strided_slice %122 {offsets = [0, 0], sizes = [8, 16], strides = [1, 1]} : vector<8x32xf32> to vector<8x16xf32>
    %124 = vector.extract_strided_slice %122 {offsets = [0, 16], sizes = [8, 16], strides = [1, 1]} : vector<8x32xf32> to vector<8x16xf32>
    %125 = arith.addf %123, %124 : vector<8x16xf32>
    %cst_63 = arith.constant dense<0.000000e+00> : vector<8x8xf32>
    %126 = tpu.matmul %125, %4, %cst_63 {dimension_numbers = #tpu.dot_dimension_numbers<[1], [0], [0], [1], [0, 0, 1, 1], [], []>} : vector<8x16xf32>, vector<16x8xf32>, vector<8x8xf32> -> vector<8x8xf32>
    %c0_64 = arith.constant 0 : index
    %c0_65 = arith.constant 0 : index
    %c40 = arith.constant 40 : index
    %127 = vector.load %arg4[%c0_64, %c0_65, %c40] : memref<1x8x64xf32, #tpu.memory_space<vmem>>, vector<1x8x8xf32>
    %128 = vector.shape_cast %127 : vector<1x8x8xf32> to vector<8x8xf32>
    %129 = vector.broadcast %1 : f32 to vector<8x8xf32>
    %130 = arith.mulf %129, %128 : vector<8x8xf32>
    %131 = vector.broadcast %0 : f32 to vector<8x8xf32>
    %132 = arith.mulf %131, %126 : vector<8x8xf32>
    %133 = arith.addf %130, %132 : vector<8x8xf32>
    %c0_66 = arith.constant 0 : index
    %c0_67 = arith.constant 0 : index
    %c40_68 = arith.constant 40 : index
    %134 = vector.load %arg8[%c0_66, %c0_67, %c40_68] : memref<1x8x64xf32, #tpu.memory_space<vmem>>, vector<1x8x8xf32>
    %135 = vector.shape_cast %134 : vector<1x8x8xf32> to vector<8x8xf32>
    %136 = vector.shape_cast %133 : vector<8x8xf32> to vector<1x8x8xf32>
    tpu.vector_store %arg8[%c0_66, %c0_67, %c40_68], %136 {strides = array<i32>} : memref<1x8x64xf32, #tpu.memory_space<vmem>>, vector<1x8x8xf32>,
    %c0_69 = arith.constant 0 : index
    %c0_70 = arith.constant 0 : index
    %c192 = arith.constant 192 : index
    %137 = vector.load %arg3[%c0_69, %c0_70, %c192] : memref<1x4x256xf32, #tpu.memory_space<vmem>>, vector<1x4x32xf32>
    %138 = vector.shape_cast %137 : vector<1x4x32xf32> to vector<4x32xf32>
    %cst_71 = arith.constant dense<0.000000e+00> : vector<8x32xf32>
    %139 = tpu.matmul %2, %138, %cst_71 {dimension_numbers = #tpu.dot_dimension_numbers<[1], [0], [0], [1], [0, 0, 1, 1], [], []>} : vector<8x4xf32>, vector<4x32xf32>, vector<8x32xf32> -> vector<8x32xf32>
    %140 = vector.broadcast %3 : vector<8x1xf32> to vector<8x32xf32>
    %141 = arith.addf %139, %140 : vector<8x32xf32>
    %cst_72 = arith.constant 2.000000e-01 : f32
    %142 = vector.broadcast %cst_72 : f32 to vector<8x32xf32>
    %143 = arith.mulf %142, %141 : vector<8x32xf32>
    %144 = arith.maximumf %141, %143 : vector<8x32xf32>
    %145 = vector.extract_strided_slice %144 {offsets = [0, 0], sizes = [8, 16], strides = [1, 1]} : vector<8x32xf32> to vector<8x16xf32>
    %146 = vector.extract_strided_slice %144 {offsets = [0, 16], sizes = [8, 16], strides = [1, 1]} : vector<8x32xf32> to vector<8x16xf32>
    %147 = arith.addf %145, %146 : vector<8x16xf32>
    %cst_73 = arith.constant dense<0.000000e+00> : vector<8x8xf32>
    %148 = tpu.matmul %147, %4, %cst_73 {dimension_numbers = #tpu.dot_dimension_numbers<[1], [0], [0], [1], [0, 0, 1, 1], [], []>} : vector<8x16xf32>, vector<16x8xf32>, vector<8x8xf32> -> vector<8x8xf32>
    %c0_74 = arith.constant 0 : index
    %c0_75 = arith.constant 0 : index
    %c48 = arith.constant 48 : index
    %149 = vector.load %arg4[%c0_74, %c0_75, %c48] : memref<1x8x64xf32, #tpu.memory_space<vmem>>, vector<1x8x8xf32>
    %150 = vector.shape_cast %149 : vector<1x8x8xf32> to vector<8x8xf32>
    %151 = vector.broadcast %1 : f32 to vector<8x8xf32>
    %152 = arith.mulf %151, %150 : vector<8x8xf32>
    %153 = vector.broadcast %0 : f32 to vector<8x8xf32>
    %154 = arith.mulf %153, %148 : vector<8x8xf32>
    %155 = arith.addf %152, %154 : vector<8x8xf32>
    %c0_76 = arith.constant 0 : index
    %c0_77 = arith.constant 0 : index
    %c48_78 = arith.constant 48 : index
    %156 = vector.load %arg8[%c0_76, %c0_77, %c48_78] : memref<1x8x64xf32, #tpu.memory_space<vmem>>, vector<1x8x8xf32>
    %157 = vector.shape_cast %156 : vector<1x8x8xf32> to vector<8x8xf32>
    %158 = vector.shape_cast %155 : vector<8x8xf32> to vector<1x8x8xf32>
    tpu.vector_store %arg8[%c0_76, %c0_77, %c48_78], %158 {strides = array<i32>} : memref<1x8x64xf32, #tpu.memory_space<vmem>>, vector<1x8x8xf32>,
    %c0_79 = arith.constant 0 : index
    %c0_80 = arith.constant 0 : index
    %c224 = arith.constant 224 : index
    %159 = vector.load %arg3[%c0_79, %c0_80, %c224] : memref<1x4x256xf32, #tpu.memory_space<vmem>>, vector<1x4x32xf32>
    %160 = vector.shape_cast %159 : vector<1x4x32xf32> to vector<4x32xf32>
    %cst_81 = arith.constant dense<0.000000e+00> : vector<8x32xf32>
    %161 = tpu.matmul %2, %160, %cst_81 {dimension_numbers = #tpu.dot_dimension_numbers<[1], [0], [0], [1], [0, 0, 1, 1], [], []>} : vector<8x4xf32>, vector<4x32xf32>, vector<8x32xf32> -> vector<8x32xf32>
    %162 = vector.broadcast %3 : vector<8x1xf32> to vector<8x32xf32>
    %163 = arith.addf %161, %162 : vector<8x32xf32>
    %cst_82 = arith.constant 2.000000e-01 : f32
    %164 = vector.broadcast %cst_82 : f32 to vector<8x32xf32>
    %165 = arith.mulf %164, %163 : vector<8x32xf32>
    %166 = arith.maximumf %163, %165 : vector<8x32xf32>
    %167 = vector.extract_strided_slice %166 {offsets = [0, 0], sizes = [8, 16], strides = [1, 1]} : vector<8x32xf32> to vector<8x16xf32>
    %168 = vector.extract_strided_slice %166 {offsets = [0, 16], sizes = [8, 16], strides = [1, 1]} : vector<8x32xf32> to vector<8x16xf32>
    %169 = arith.addf %167, %168 : vector<8x16xf32>
    %cst_83 = arith.constant dense<0.000000e+00> : vector<8x8xf32>
    %170 = tpu.matmul %169, %4, %cst_83 {dimension_numbers = #tpu.dot_dimension_numbers<[1], [0], [0], [1], [0, 0, 1, 1], [], []>} : vector<8x16xf32>, vector<16x8xf32>, vector<8x8xf32> -> vector<8x8xf32>
    %c0_84 = arith.constant 0 : index
    %c0_85 = arith.constant 0 : index
    %c56 = arith.constant 56 : index
    %171 = vector.load %arg4[%c0_84, %c0_85, %c56] : memref<1x8x64xf32, #tpu.memory_space<vmem>>, vector<1x8x8xf32>
    %172 = vector.shape_cast %171 : vector<1x8x8xf32> to vector<8x8xf32>
    %173 = vector.broadcast %1 : f32 to vector<8x8xf32>
    %174 = arith.mulf %173, %172 : vector<8x8xf32>
    %175 = vector.broadcast %0 : f32 to vector<8x8xf32>
    %176 = arith.mulf %175, %170 : vector<8x8xf32>
    %177 = arith.addf %174, %176 : vector<8x8xf32>
    %c0_86 = arith.constant 0 : index
    %c0_87 = arith.constant 0 : index
    %c56_88 = arith.constant 56 : index
    %178 = vector.load %arg8[%c0_86, %c0_87, %c56_88] : memref<1x8x64xf32, #tpu.memory_space<vmem>>, vector<1x8x8xf32>
    %179 = vector.shape_cast %178 : vector<1x8x8xf32> to vector<8x8xf32>
    %180 = vector.shape_cast %177 : vector<8x8xf32> to vector<1x8x8xf32>
    tpu.vector_store %arg8[%c0_86, %c0_87, %c56_88], %180 {strides = array<i32>} : memref<1x8x64xf32, #tpu.memory_space<vmem>>, vector<1x8x8xf32>,
    return
  }
  func.func @transform_0(%arg0: i32, %arg1: i32) -> i32 {
    %c0_i32 = arith.constant 0 : i32
    %c0_i32_0 = arith.constant 0 : i32
    return %c0_i32 : i32
  }
  func.func @transform_1(%arg0: i32, %arg1: i32) -> (i32, i32, i32) {
    %c0_i32 = arith.constant 0 : i32
    %c0_i32_0 = arith.constant 0 : i32
    return %arg0, %c0_i32, %arg1 : i32, i32, i32
  }
  func.func @transform_2(%arg0: i32, %arg1: i32) -> (i32, i32, i32) {
    %c0_i32 = arith.constant 0 : i32
    %c0_i32_0 = arith.constant 0 : i32
    return %arg0, %c0_i32, %arg1 : i32, i32, i32
  }
  func.func @transform_3(%arg0: i32, %arg1: i32) -> (i32, i32) {
    %c0_i32 = arith.constant 0 : i32
    %c0_i32_0 = arith.constant 0 : i32
    %c0_i32_1 = arith.constant 0 : i32
    return %c0_i32, %c0_i32_0 : i32, i32
  }
  func.func @transform_4(%arg0: i32, %arg1: i32) -> (i32, i32) {
    %c0_i32 = arith.constant 0 : i32
    %c0_i32_0 = arith.constant 0 : i32
    %c0_i32_1 = arith.constant 0 : i32
    return %c0_i32, %c0_i32_0 : i32, i32
  }
  func.func @transform_5(%arg0: i32, %arg1: i32) -> (i32, i32) {
    %c0_i32 = arith.constant 0 : i32
    %c0_i32_0 = arith.constant 0 : i32
    %c0_i32_1 = arith.constant 0 : i32
    return %c0_i32, %c0_i32_0 : i32, i32
  }
  func.func @transform_6(%arg0: i32, %arg1: i32) -> (i32, i32, i32) {
    %c0_i32 = arith.constant 0 : i32
    %c0_i32_0 = arith.constant 0 : i32
    return %arg0, %c0_i32, %arg1 : i32, i32, i32
  }
}

</mosaic_0001>

<llo_original>
// kernel: tpu_custom_call.1
$region0: #{tpu_custom_call.1}
  #allocation0 [shape = 'u32[]', space=smem, size = 0x4, offset = 0x4, fixed_abs, tag = 'smem constant byte address 0x4 - core index']
  #allocation1 [shape = 'u32[72,128]{1,0:T(1,128)}', space=vmem, size = 0x9000, scoped, tag = 'internal scratch']
  #allocation2 [shape = 'f32[1]{0:T(128)S(6)}', space=smem, size = 0x200, scoped, tag = 'scoped memory for tpu_custom_call.1']
  %s0 = inlined_call_operand.<no memory space> [shape: f32[1], index: 0, kind: input, shape index: {}]
  %s1 = inlined_call_operand.vmem [shape: f32[2,4,256], index: 1, kind: input, shape index: {}]
  %s2 = inlined_call_operand.vmem [shape: f32[2,8,64], index: 2, kind: input, shape index: {}]
  %s3 = inlined_call_operand.vmem [shape: f32[8,4], index: 3, kind: input, shape index: {}]
  %s4 = inlined_call_operand.vmem [shape: f32[8,1], index: 4, kind: input, shape index: {}]
  %s5 = inlined_call_operand.vmem [shape: f32[16,8], index: 5, kind: input, shape index: {}]
  %s6 = inlined_call_operand.hbm [shape: f32[2,8,64], index: 6, kind: output, shape index: {}]
  %s7 = sld [smem:[#allocation0]]
  $region57: #{tpu_custom_call.1} parent=0
    _
  %s9 = ssub.s32 1, %s7
  %s10 = scalar_select 0, %s9, %s7
  %11 = sst [smem:[#allocation2]] %s0
  $region1: #{tpu_custom_call.1} parent=0
    #allocation3 [shape = 'u8[8192]{0}', space=vmem, size = 0x2000, scoped, tag = 'output window, operand 0']
    #allocation4 [shape = 's32[2]{0}', space=sflag, size = 0x8, scoped, tag = 'scoped memory for tpu_custom_call.1']
    %12 = vsyncpa [#allocation4], 0
    %s13 = scalar_lea.sflag [#allocation4], 1
    %14 = vsyncpa %s13, 0
    loop: start=0, step=1, limit=4
    $region2: #{tpu_custom_call.1} parent=1 // loop_pre_header
      _
    $region3: #{tpu_custom_call.1} parent=1 // loop_header
      %s16 = sphi 0, %s20
      %p17 = scmp.ge.s32.totalorder %s16, 4
      %s23 = sphi 0, %s35
      %s24 = sphi 0, %s31
      %s25 = sphi 0, %s23
      %s26 = sphi 0, %s24
      %s27 = sphi 0, %s25
      %s28 = sphi 0, %s26
      %s36 = sphi 0, %s36
      %s38 = sphi 0, %s36
      %s39 = sphi 0, %s38
      %s53 = sphi 0, %s39
      %s61 = sphi 0, %s63
      %s64 = sphi 0, %s61
      %s65 = sphi 0, %s64
      %s81 = sphi 0, %s65
      %s89 = sphi 0, %s91
      %s92 = sphi 0, %s89
      %s93 = sphi 0, %s92
      %s109 = sphi 0, %s93
      %s113 = sphi 0, %s113
      %s115 = sphi 0, %s113
      %s116 = sphi 0, %s115
      %s130 = sphi 0, %s116
      %s134 = sphi 0, %s134
      %s136 = sphi 0, %s134
      %s137 = sphi 0, %s136
      %s151 = sphi 0, %s137
      %s155 = sphi 0, %s155
      %s157 = sphi 0, %s155
      %s158 = sphi 0, %s157
      %s172 = sphi 0, %s158
      %s180 = sphi 0, %s182
      %s183 = sphi 0, %s180
      %s184 = sphi 0, %s183
      %s200 = sphi 0, %s184
    $region4: #{tpu_custom_call.1} parent=1 // loop_header_branch
      %19 = sbr.rel (%p17) target = $region8
    $region5: #{tpu_custom_call.1} parent=1 // loop_body
      %s21 = ssub.s32 %s16, 1
      %s22 = ssub.s32 %s16, 2
      %s29 = sadd.s32 1, %s24
      %p30 = scmp.ge.s32.totalorder %s29, 1
      %s31 = scalar_select %p30, 0, %s29
      %s32 = sadd.s32 1, %s23
      %s33 = scalar_select %p30, %s32, %s23
      %p34 = scmp.ge.s32.totalorder %s33, 2
      %s35 = scalar_select %p34, 0, %s33
      %s37 = sadd.s32 %s36, 1
      %p40 = scmp.eq.s32.totalorder %s16, 1
      %p41 = scmp.ne.s32.totalorder %s36, %s38
      %p42 = scmp.eq.s32.totalorder %s16, 0
      %p43 = por %p41, %p42
      %p44 = scmp.ne.s32.totalorder %s36, %s38
      %p45 = scmp.eq.s32.totalorder %s21, 1
      %p46 = por %p44, %p45
      %p47 = scmp.ne.s32.totalorder %s38, %s39
      %p48 = scmp.eq.s32.totalorder %s21, 0
      %p49 = por %p47, %p48
      %p50 = scmp.ne.s32.totalorder %s38, %s39
      %p51 = scmp.eq.s32.totalorder %s22, 1
      %p52 = por %p50, %p51
      %p54 = scmp.ne.s32.totalorder %s39, %s53
      %p55 = scmp.eq.s32.totalorder %s22, 0
      %p56 = por %p54, %p55
      %s57 = ssub.s32 %s23, %s35
      %s58 = ssub.s32 %s24, %s31
      %s59 = sor.u32 %s57, %s58
      %p60 = scmp.eq.s32.totalorder %s59, 0
      %s62 = sadd.s32 %s61, 1
      %s63 = scalar_select %p60, %s61, %s62
      %p66 = pneg %p60
      %p67 = scmp.eq.s32.totalorder %s16, 1
      %p68 = por %p66, %p67
      %p69 = scmp.ne.s32.totalorder %s61, %s64
      %p70 = scmp.eq.s32.totalorder %s16, 0
      %p71 = por %p69, %p70
      %p72 = scmp.ne.s32.totalorder %s61, %s64
      %p73 = scmp.eq.s32.totalorder %s21, 1
      %p74 = por %p72, %p73
      %p75 = scmp.ne.s32.totalorder %s64, %s65
      %p76 = scmp.eq.s32.totalorder %s21, 0
      %p77 = por %p75, %p76
      %p78 = scmp.ne.s32.totalorder %s64, %s65
      %p79 = scmp.eq.s32.totalorder %s22, 1
      %p80 = por %p78, %p79
      %p82 = scmp.ne.s32.totalorder %s65, %s81
      %p83 = scmp.eq.s32.totalorder %s22, 0
      %p84 = por %p82, %p83
      %s85 = ssub.s32 %s23, %s35
      %s86 = ssub.s32 %s24, %s31
      %s87 = sor.u32 %s85, %s86
      %p88 = scmp.eq.s32.totalorder %s87, 0
      %s90 = sadd.s32 %s89, 1
      %s91 = scalar_select %p88, %s89, %s90
      %p94 = pneg %p88
      %p95 = scmp.eq.s32.totalorder %s16, 1
      %p96 = por %p94, %p95
      %p97 = scmp.ne.s32.totalorder %s89, %s92
      %p98 = scmp.eq.s32.totalorder %s16, 0
      %p99 = por %p97, %p98
      %p100 = scmp.ne.s32.totalorder %s89, %s92
      %p101 = scmp.eq.s32.totalorder %s21, 1
      %p102 = por %p100, %p101
      %p103 = scmp.ne.s32.totalorder %s92, %s93
      %p104 = scmp.eq.s32.totalorder %s21, 0
      %p105 = por %p103, %p104
      %p106 = scmp.ne.s32.totalorder %s92, %s93
      %p107 = scmp.eq.s32.totalorder %s22, 1
      %p108 = por %p106, %p107
      %p110 = scmp.ne.s32.totalorder %s93, %s109
      %p111 = scmp.eq.s32.totalorder %s22, 0
      %p112 = por %p110, %p111
      %s114 = sadd.s32 %s113, 1
      %p117 = scmp.eq.s32.totalorder %s16, 1
      %p118 = scmp.ne.s32.totalorder %s113, %s115
      %p119 = scmp.eq.s32.totalorder %s16, 0
      %p120 = por %p118, %p119
      %p121 = scmp.ne.s32.totalorder %s113, %s115
      %p122 = scmp.eq.s32.totalorder %s21, 1
      %p123 = por %p121, %p122
      %p124 = scmp.ne.s32.totalorder %s115, %s116
      %p125 = scmp.eq.s32.totalorder %s21, 0
      %p126 = por %p124, %p125
      %p127 = scmp.ne.s32.totalorder %s115, %s116
      %p128 = scmp.eq.s32.totalorder %s22, 1
      %p129 = por %p127, %p128
      %p131 = scmp.ne.s32.totalorder %s116, %s130
      %p132 = scmp.eq.s32.totalorder %s22, 0
      %p133 = por %p131, %p132
      %s135 = sadd.s32 %s134, 1
      %p138 = scmp.eq.s32.totalorder %s16, 1
      %p139 = scmp.ne.s32.totalorder %s134, %s136
      %p140 = scmp.eq.s32.totalorder %s16, 0
      %p141 = por %p139, %p140
      %p142 = scmp.ne.s32.totalorder %s134, %s136
      %p143 = scmp.eq.s32.totalorder %s21, 1
      %p144 = por %p142, %p143
      %p145 = scmp.ne.s32.totalorder %s136, %s137
      %p146 = scmp.eq.s32.totalorder %s21, 0
      %p147 = por %p145, %p146
      %p148 = scmp.ne.s32.totalorder %s136, %s137
      %p149 = scmp.eq.s32.totalorder %s22, 1
      %p150 = por %p148, %p149
      %p152 = scmp.ne.s32.totalorder %s137, %s151
      %p153 = scmp.eq.s32.totalorder %s22, 0
      %p154 = por %p152, %p153
      %s156 = sadd.s32 %s155, 1
      %p159 = scmp.eq.s32.totalorder %s16, 1
      %p160 = scmp.ne.s32.totalorder %s155, %s157
      %p161 = scmp.eq.s32.totalorder %s16, 0
      %p162 = por %p160, %p161
      %p163 = scmp.ne.s32.totalorder %s155, %s157
      %p164 = scmp.eq.s32.totalorder %s21, 1
      %p165 = por %p163, %p164
      %p166 = scmp.ne.s32.totalorder %s157, %s158
      %p167 = scmp.eq.s32.totalorder %s21, 0
      %p168 = por %p166, %p167
      %p169 = scmp.ne.s32.totalorder %s157, %s158
      %p170 = scmp.eq.s32.totalorder %s22, 1
      %p171 = por %p169, %p170
      %p173 = scmp.ne.s32.totalorder %s158, %s172
      %p174 = scmp.eq.s32.totalorder %s22, 0
      %p175 = por %p173, %p174
      %s176 = ssub.s32 %s23, %s35
      %s177 = ssub.s32 %s24, %s31
      %s178 = sor.u32 %s176, %s177
      %p179 = scmp.eq.s32.totalorder %s178, 0
      %s181 = sadd.s32 %s180, 1
      %s182 = scalar_select %p179, %s180, %s181
      %p185 = pneg %p179
      %p186 = scmp.eq.s32.totalorder %s16, 1
      %p187 = por %p185, %p186
      %p188 = scmp.ne.s32.totalorder %s180, %s183
      %p189 = scmp.eq.s32.totalorder %s16, 0
      %p190 = por %p188, %p189
      %p191 = scmp.ne.s32.totalorder %s180, %s183
      %p192 = scmp.eq.s32.totalorder %s21, 1
      %p193 = por %p191, %p192
      %p194 = scmp.ne.s32.totalorder %s183, %s184
      %p195 = scmp.eq.s32.totalorder %s21, 0
      %p196 = por %p194, %p195
      %p197 = scmp.ne.s32.totalorder %s183, %s184
      %p198 = scmp.eq.s32.totalorder %s22, 1
      %p199 = por %p197, %p198
      %p201 = scmp.ne.s32.totalorder %s184, %s200
      %p202 = scmp.eq.s32.totalorder %s22, 0
      %p203 = por %p201, %p202
      %p204 = scmp.le.s32.totalorder 1, %s16
      %p205 = scmp.lt.s32.totalorder %s16, 3
      %p206 = pnand %p204, %p205
      %p207 = pneg %p206
      // Predicated region
      $region9: #{tpu_custom_call.1} parent=5 // pred_check
        _
      $region10: #{tpu_custom_call.1} parent=5 // pred_check_branch
        %209 = sbr.rel (%p206) target = $region12
      $region11: #{tpu_custom_call.1} parent=5 // pred_region
        %s210 = ssub.s32 %s16, 1
        // Predicated region
        $region13: #{tpu_custom_call.1} parent=11 // pred_check
          %p211 = pneg %p49
        $region14: #{tpu_custom_call.1} parent=11 // pred_check_branch
          %213 = sbr.rel (%p211) target = $region16
        $region15: #{tpu_custom_call.1} parent=11 // pred_region
          _
        $region16: #{tpu_custom_call.1} parent=11 // pred_fallthru
          _
        // Predicated region
        $region17: #{tpu_custom_call.1} parent=11 // pred_check
          %p214 = pneg %p126
        $region18: #{tpu_custom_call.1} parent=11 // pred_check_branch
          %216 = sbr.rel (%p214) target = $region20
        $region19: #{tpu_custom_call.1} parent=11 // pred_region
          _
        $region20: #{tpu_custom_call.1} parent=11 // pred_fallthru
          _
        // Predicated region
        $region21: #{tpu_custom_call.1} parent=11 // pred_check
          %p217 = pneg %p147
        $region22: #{tpu_custom_call.1} parent=11 // pred_check_branch
          %219 = sbr.rel (%p217) target = $region24
        $region23: #{tpu_custom_call.1} parent=11 // pred_region
          _
        $region24: #{tpu_custom_call.1} parent=11 // pred_fallthru
          _
        // Predicated region
        $region25: #{tpu_custom_call.1} parent=11 // pred_check
          %p220 = pneg %p168
        $region26: #{tpu_custom_call.1} parent=11 // pred_check_branch
          %222 = sbr.rel (%p220) target = $region28
        $region27: #{tpu_custom_call.1} parent=11 // pred_region
          _
        $region28: #{tpu_custom_call.1} parent=11 // pred_fallthru
          _
      $region12: #{tpu_custom_call.1} parent=5 // pred_fallthru
        _
      %p223 = scmp.lt.s32.totalorder %s16, 2
      // Predicated region
      $region29: #{tpu_custom_call.1} parent=5 // pred_check
        %p224 = pneg %p223
      $region30: #{tpu_custom_call.1} parent=5 // pred_check_branch
        %226 = sbr.rel (%p224) target = $region32
      $region31: #{tpu_custom_call.1} parent=5 // pred_region
        // Predicated region
        $region33: #{tpu_custom_call.1} parent=31 // pred_check
          %p227 = pneg %p71
        $region34: #{tpu_custom_call.1} parent=31 // pred_check_branch
          %229 = sbr.rel (%p227) target = $region36
        $region35: #{tpu_custom_call.1} parent=31 // pred_region
          %s230 = smul.u32 2, %s24
          %p231 = scmp.lt.s32.totalorder %s23, 1
          %s232 = scalar_select %p231, %s23, 1
          %p233 = scmp.lt.s32.totalorder %s230, 1
          %s234 = scalar_select %p233, %s230, 1
          %s235 = smul.addr %s232, 2
          %s236 = sadd.s32 %s234, %s235
          %s237 = smul.addr %s236, 4
          %s238 = scalar_lea.vmem %s1, %s237
          %s239 = smul.u32 2, %s24
        $region36: #{tpu_custom_call.1} parent=31 // pred_fallthru
          _
        // Predicated region
        $region37: #{tpu_custom_call.1} parent=31 // pred_check
          %p240 = pneg %p99
        $region38: #{tpu_custom_call.1} parent=31 // pred_check_branch
          %242 = sbr.rel (%p240) target = $region40
        $region39: #{tpu_custom_call.1} parent=31 // pred_region
          %p243 = scmp.lt.s32.totalorder %s23, 1
          %s244 = scalar_select %p243, %s23, 1
          %p245 = scmp.lt.s32.totalorder %s24, 0
          %s246 = scalar_select %p245, %s24, 0
          %s247 = sadd.s32 %s246, %s244
          %s248 = smul.addr %s247, 8
          %s249 = scalar_lea.vmem %s2, %s248
        $region40: #{tpu_custom_call.1} parent=31 // pred_fallthru
          _
      $region32: #{tpu_custom_call.1} parent=5 // pred_fallthru
        _
      %p250 = scmp.le.s32.totalorder 1, %s16
      %p251 = scmp.lt.s32.totalorder %s16, 3
      %p252 = pnand %p250, %p251
      %p253 = pneg %p252
      // Predicated region
      $region41: #{tpu_custom_call.1} parent=5 // pred_check
        _
      $region42: #{tpu_custom_call.1} parent=5 // pred_check_branch
        %255 = sbr.rel (%p252) target = $region44
      $region43: #{tpu_custom_call.1} parent=5 // pred_region
        %s256 = ssub.s32 %s16, 1
        %p257 = pneg %p49
        %p258 = pneg %p46
        %s259 = smul.u32 2, %s26
        %p260 = scmp.lt.s32.totalorder %s25, 1
        %s261 = scalar_select %p260, %s25, 1
        %p262 = scmp.lt.s32.totalorder %s259, 1
        %s263 = scalar_select %p262, %s259, 1
        %s264 = smul.addr %s261, 2
        %s265 = sadd.s32 %s263, %s264
        %s266 = smul.addr %s265, 4
        %s267 = scalar_lea.vmem %s1, %s266
        %p268 = pneg %p77
        %p269 = pneg %p74
        %p270 = scmp.lt.s32.totalorder %s25, 1
        %s271 = scalar_select %p270, %s25, 1
        %p272 = scmp.lt.s32.totalorder %s26, 0
        %s273 = scalar_select %p272, %s26, 0
        %s274 = sadd.s32 %s273, %s271
        %s275 = smul.addr %s274, 8
        %s276 = scalar_lea.vmem %s2, %s275
        %p277 = pneg %p105
        %p278 = pneg %p102
        %p279 = pneg %p126
        %p280 = pneg %p123
        %p281 = pneg %p147
        %p282 = pneg %p144
        %p283 = pneg %p168
        %p284 = pneg %p165
        %p285 = pneg %p196
        %p286 = pneg %p193
        %s287 = sand.u32 %s183, 1
        %s288 = scalar_lea.sflag [#allocation4], %s287
        %s289 = sand.u32 %s183, 1
        %s290 = smul.addr %s289, 8
        %s291 = scalar_lea.vmem [#allocation3], %s290
        %s292 = smul.u32 2, %s26
        %p293 = scmp.lt.s32.totalorder %s25, 1
        %s294 = scalar_select %p293, %s25, 1
        %p295 = scmp.lt.s32.totalorder %s292, 1
        %s296 = scalar_select %p295, %s292, 1
        %s297 = smul.addr %s294, 2
        %s298 = sadd.s32 %s296, %s297
        %s299 = smul.addr %s298, 4
        %s300 = scalar_lea.vmem %s1, %s299
        %s301 = smul.u32 2, %s26
        %p302 = scmp.lt.s32.totalorder %s25, 1
        %s303 = scalar_select %p302, %s25, 1
        %p304 = scmp.lt.s32.totalorder %s26, 0
        %s305 = scalar_select %p304, %s26, 0
        %s306 = sadd.s32 %s305, %s303
        %s307 = smul.addr %s306, 8
        %s308 = scalar_lea.vmem %s2, %s307
        %s309 = sld [smem:[#allocation2]]
        %s310 = ssub.f32 1.0, %s309
        %v311 = vld [vmem:[%s3] sm:$0xff]
        %v312 = vld [vmem:[%s4] sm:$0xff]
        %v313 = vld [vmem:[%s5] sm:$0xff]
        %v314 = vld [vmem:[%s5 + $0x8] sm:$0xff]
        %v315 = vld [vmem:[%s300] sm:$0xf]
        %317 = vset.pattern.permute.xlu0 0
        %318 = vperm.xlu0 %317, %v312
        %v319 = vpop.permute.xlu0 %318
        %vm321 = vcmask 31744
        %v323 = vsel %vm321, %v311, 0
        %vm325 = vcmask 1043456
        %v327 = vsel %vm325, %v315, 0
        %329 = vmatpush.msra.mxu0 0.0
        %330 = vmatpush.msra.mxu0 0.0
        %331 = vmatpush.msra.mxu0 0.0
        %332 = vmatpush.msra.mxu0 0.0
        %333 = vmatpush.msra.mxu0 0.0
        %334 = vmatpush.msra.mxu0 0.0
        %335 = vmatpush.msra.mxu0 0.0
        %336 = vmatpush.msra.mxu0 0.0
        %337 = vmatpush.msra.mxu0 0.0
        %338 = vmatpush.msra.mxu0 0.0
        %339 = vmatpush.msra.mxu0 0.0
        %340 = vmatpush.msra.mxu0 0.0
        %341 = vmatpush.msra.mxu0 0.0
        %342 = vmatpush.msra.mxu0 0.0
        %343 = vmatpush.msra.mxu0 0.0
        %344 = vmatpush.msra.mxu0 %v327
        %345 = vmatmul.f32.gmra.mxu0 %v323
        %v346 = vpop.f32.mrf.mxu0
        %v347 = vadd.f32 %v319, %v346
        %348 = vdwg.mxu0
        %v349 = vmul.f32 %v347, 0.2
        %v350 = vmax.f32 %v347, %v349
        %352 = vrot.lane.b32.xlu0 %v350, 112
        %v353 = vpop.permute.xlu0 %352
        %v355 = vadd.f32 %v350, %v353
        %vm356 = vcmask 130048
        %v358 = vsel %vm356, %v355, 0
        %360 = vmatpush.msra.mxu0 0.0
        %361 = vmatpush.msra.mxu0 0.0
        %362 = vmatpush.msra.mxu0 0.0
        %363 = vmatpush.msra.mxu0 0.0
        %364 = vmatpush.msra.mxu0 0.0
        %365 = vmatpush.msra.mxu0 0.0
        %366 = vmatpush.msra.mxu0 0.0
        %367 = vmatpush.msra.mxu0 0.0
        %368 = vmatpush.msra.mxu0 0.0
        %369 = vmatpush.msra.mxu0 0.0
        %370 = vmatpush.msra.mxu0 0.0
        %371 = vmatpush.msra.mxu0 0.0
        %372 = vmatpush.msra.mxu0 0.0
        %373 = vmatpush.msra.mxu0 0.0
        %374 = vmatpush.msra.mxu0 %v314
        %375 = vmatpush.msra.mxu0 %v313
        %376 = vmatmul.f32.gmra.mxu0 %v358
        %v377 = vpop.f32.mrf.mxu0
        %v378 = vadd.f32 0.0, %v377
        %379 = vdwg.mxu0
        %v380 = vld [vmem:[%s308] sm:$0xff]
        %v381 = vstv %s310
        %v382 = vmul.f32 %v381, %v380
        %v383 = vstv %s309
        %v384 = vmul.f32 %v383, %v378
        %v385 = vadd.f32 %v382, %v384
        %vm386 = vcmask 64512
        %387 = vst.msk [vmem:[%s291] sm:$0xff] %vm386, %v385
        %v388 = vld [vmem:[%s300] sm:$0xf]
        %390 = vst [vmem:[#allocation1] ss:$2 sm:$0xff] %v388
        %v391 = vld.sshfl [vmem:[#allocation1] sm:$0xff pattern:$0x75316420]
        %392 = vrot.lane.b32.xlu0 %v391, 96
        %v393 = vpop.permute.xlu0 %392
        %v394 = vsel %vm325, %v393, 0
        %396 = vmatpush.msra.mxu0 0.0
        %397 = vmatpush.msra.mxu0 0.0
        %398 = vmatpush.msra.mxu0 0.0
        %399 = vmatpush.msra.mxu0 0.0
        %400 = vmatpush.msra.mxu0 0.0
        %401 = vmatpush.msra.mxu0 0.0
        %402 = vmatpush.msra.mxu0 0.0
        %403 = vmatpush.msra.mxu0 0.0
        %404 = vmatpush.msra.mxu0 0.0
        %405 = vmatpush.msra.mxu0 0.0
        %406 = vmatpush.msra.mxu0 0.0
        %407 = vmatpush.msra.mxu0 0.0
        %408 = vmatpush.msra.mxu0 0.0
        %409 = vmatpush.msra.mxu0 0.0
        %410 = vmatpush.msra.mxu0 0.0
        %411 = vmatpush.msra.mxu0 %v394
        %412 = vmatmul.f32.gmra.mxu0 %v323
        %v413 = vpop.f32.mrf.mxu0
        %v414 = vadd.f32 %v319, %v413
        %415 = vdwg.mxu0
        %v416 = vmul.f32 %v414, 0.2
        %v417 = vmax.f32 %v414, %v416
        %419 = vrot.lane.b32.xlu0 %v417, 112
        %v420 = vpop.permute.xlu0 %419
        %v422 = vadd.f32 %v417, %v420
        %v424 = vsel %vm356, %v422, 0
        %426 = vmatpush.msra.mxu0 0.0
        %427 = vmatpush.msra.mxu0 0.0
        %428 = vmatpush.msra.mxu0 0.0
        %429 = vmatpush.msra.mxu0 0.0
        %430 = vmatpush.msra.mxu0 0.0
        %431 = vmatpush.msra.mxu0 0.0
        %432 = vmatpush.msra.mxu0 0.0
        %433 = vmatpush.msra.mxu0 0.0
        %434 = vmatpush.msra.mxu0 0.0
        %435 = vmatpush.msra.mxu0 0.0
        %436 = vmatpush.msra.mxu0 0.0
        %437 = vmatpush.msra.mxu0 0.0
        %438 = vmatpush.msra.mxu0 0.0
        %439 = vmatpush.msra.mxu0 0.0
        %440 = vmatpush.msra.mxu0 %v314
        %441 = vmatpush.msra.mxu0 %v313
        %442 = vmatmul.f32.gmra.mxu0 %v424
        %v443 = vpop.f32.mrf.mxu0
        %v444 = vadd.f32 0.0, %v443
        %445 = vdwg.mxu0
        %v446 = vld [vmem:[%s308] sm:$0xff]
        %v447 = vmul.f32 %v381, %v446
        %v448 = vmul.f32 %v383, %v444
        %450 = vrot.lane.b32.xlu0 %v448, 8
        %v451 = vpop.permute.xlu0 %450
        %v453 = vadd.f32 %v447, %v451
        %vm454 = vcmask 130112
        %455 = vst.msk [vmem:[%s291] sm:$0xff] %vm454, %v453
        %v456 = vld [vmem:[%s300] sm:$0xf]
        %458 = vst [vmem:[#allocation1] ss:$2 sm:$0xff] %v456
        %v459 = vld.sshfl [vmem:[#allocation1] sm:$0xff pattern:$0x75316420]
        %460 = vrot.lane.b32.xlu0 %v459, 64
        %v461 = vpop.permute.xlu0 %460
        %v462 = vsel %vm325, %v461, 0
        %464 = vmatpush.msra.mxu0 0.0
        %465 = vmatpush.msra.mxu0 0.0
        %466 = vmatpush.msra.mxu0 0.0
        %467 = vmatpush.msra.mxu0 0.0
        %468 = vmatpush.msra.mxu0 0.0
        %469 = vmatpush.msra.mxu0 0.0
        %470 = vmatpush.msra.mxu0 0.0
        %471 = vmatpush.msra.mxu0 0.0
        %472 = vmatpush.msra.mxu0 0.0
        %473 = vmatpush.msra.mxu0 0.0
        %474 = vmatpush.msra.mxu0 0.0
        %475 = vmatpush.msra.mxu0 0.0
        %476 = vmatpush.msra.mxu0 0.0
        %477 = vmatpush.msra.mxu0 0.0
        %478 = vmatpush.msra.mxu0 0.0
        %479 = vmatpush.msra.mxu0 %v462
        %480 = vmatmul.f32.gmra.mxu0 %v323
        %v481 = vpop.f32.mrf.mxu0
        %v482 = vadd.f32 %v319, %v481
        %483 = vdwg.mxu0
        %v484 = vmul.f32 %v482, 0.2
        %v485 = vmax.f32 %v482, %v484
        %487 = vrot.lane.b32.xlu0 %v485, 112
        %v488 = vpop.permute.xlu0 %487
        %v490 = vadd.f32 %v485, %v488
        %v492 = vsel %vm356, %v490, 0
        %494 = vmatpush.msra.mxu0 0.0
        %495 = vmatpush.msra.mxu0 0.0
        %496 = vmatpush.msra.mxu0 0.0
        %497 = vmatpush.msra.mxu0 0.0
        %498 = vmatpush.msra.mxu0 0.0
        %499 = vmatpush.msra.mxu0 0.0
        %500 = vmatpush.msra.mxu0 0.0
        %501 = vmatpush.msra.mxu0 0.0
        %502 = vmatpush.msra.mxu0 0.0
        %503 = vmatpush.msra.mxu0 0.0
        %504 = vmatpush.msra.mxu0 0.0
        %505 = vmatpush.msra.mxu0 0.0
        %506 = vmatpush.msra.mxu0 0.0
        %507 = vmatpush.msra.mxu0 0.0
        %508 = vmatpush.msra.mxu0 %v314
        %509 = vmatpush.msra.mxu0 %v313
        %510 = vmatmul.f32.gmra.mxu0 %v492
        %v511 = vpop.f32.mrf.mxu0
        %v512 = vadd.f32 0.0, %v511
        %513 = vdwg.mxu0
        %v514 = vld [vmem:[%s308] sm:$0xff]
        %v515 = vmul.f32 %v381, %v514
        %v516 = vmul.f32 %v383, %v512
        %518 = vrot.lane.b32.xlu0 %v516, 16
        %v519 = vpop.permute.xlu0 %518
        %v521 = vadd.f32 %v515, %v519
        %vm522 = vcmask 195712
        %523 = vst.msk [vmem:[%s291] sm:$0xff] %vm522, %v521
        %v524 = vld [vmem:[%s300] sm:$0xf]
        %526 = vst [vmem:[#allocation1] ss:$2 sm:$0xff] %v524
        %v527 = vld.sshfl [vmem:[#allocation1] sm:$0xff pattern:$0x75316420]
        %528 = vrot.lane.b32.xlu0 %v527, 32
        %v529 = vpop.permute.xlu0 %528
        %v530 = vsel %vm325, %v529, 0
        %532 = vmatpush.msra.mxu0 0.0
        %533 = vmatpush.msra.mxu0 0.0
        %534 = vmatpush.msra.mxu0 0.0
        %535 = vmatpush.msra.mxu0 0.0
        %536 = vmatpush.msra.mxu0 0.0
        %537 = vmatpush.msra.mxu0 0.0
        %538 = vmatpush.msra.mxu0 0.0
        %539 = vmatpush.msra.mxu0 0.0
        %540 = vmatpush.msra.mxu0 0.0
        %541 = vmatpush.msra.mxu0 0.0
        %542 = vmatpush.msra.mxu0 0.0
        %543 = vmatpush.msra.mxu0 0.0
        %544 = vmatpush.msra.mxu0 0.0
        %545 = vmatpush.msra.mxu0 0.0
        %546 = vmatpush.msra.mxu0 0.0
        %547 = vmatpush.msra.mxu0 %v530
        %548 = vmatmul.f32.gmra.mxu0 %v323
        %v549 = vpop.f32.mrf.mxu0
        %v550 = vadd.f32 %v319, %v549
        %551 = vdwg.mxu0
        %v552 = vmul.f32 %v550, 0.2
        %v553 = vmax.f32 %v550, %v552
        %555 = vrot.lane.b32.xlu0 %v553, 112
        %v556 = vpop.permute.xlu0 %555
        %v558 = vadd.f32 %v553, %v556
        %v560 = vsel %vm356, %v558, 0
        %562 = vmatpush.msra.mxu0 0.0
        %563 = vmatpush.msra.mxu0 0.0
        %564 = vmatpush.msra.mxu0 0.0
        %565 = vmatpush.msra.mxu0 0.0
        %566 = vmatpush.msra.mxu0 0.0
        %567 = vmatpush.msra.mxu0 0.0
        %568 = vmatpush.msra.mxu0 0.0
        %569 = vmatpush.msra.mxu0 0.0
        %570 = vmatpush.msra.mxu0 0.0
        %571 = vmatpush.msra.mxu0 0.0
        %572 = vmatpush.msra.mxu0 0.0
        %573 = vmatpush.msra.mxu0 0.0
        %574 = vmatpush.msra.mxu0 0.0
        %575 = vmatpush.msra.mxu0 0.0
        %576 = vmatpush.msra.mxu0 %v314
        %577 = vmatpush.msra.mxu0 %v313
        %578 = vmatmul.f32.gmra.mxu0 %v560
        %v579 = vpop.f32.mrf.mxu0
        %v580 = vadd.f32 0.0, %v579
        %581 = vdwg.mxu0
        %v582 = vld [vmem:[%s308] sm:$0xff]
        %v583 = vmul.f32 %v381, %v582
        %v584 = vmul.f32 %v383, %v580
        %586 = vrot.lane.b32.xlu0 %v584, 24
        %v587 = vpop.permute.xlu0 %586
        %v589 = vadd.f32 %v583, %v587
        %vm590 = vcmask 261312
        %591 = vst.msk [vmem:[%s291] sm:$0xff] %vm590, %v589
        %v592 = vld [vmem:[%s300 + $0x4] sm:$0xf]
        %v594 = vsel %vm325, %v592, 0
        %596 = vmatpush.msra.mxu0 0.0
        %597 = vmatpush.msra.mxu0 0.0
        %598 = vmatpush.msra.mxu0 0.0
        %599 = vmatpush.msra.mxu0 0.0
        %600 = vmatpush.msra.mxu0 0.0
        %601 = vmatpush.msra.mxu0 0.0
        %602 = vmatpush.msra.mxu0 0.0
        %603 = vmatpush.msra.mxu0 0.0
        %604 = vmatpush.msra.mxu0 0.0
        %605 = vmatpush.msra.mxu0 0.0
        %606 = vmatpush.msra.mxu0 0.0
        %607 = vmatpush.msra.mxu0 0.0
        %608 = vmatpush.msra.mxu0 0.0
        %609 = vmatpush.msra.mxu0 0.0
        %610 = vmatpush.msra.mxu0 0.0
        %611 = vmatpush.msra.mxu0 %v594
        %612 = vmatmul.f32.gmra.mxu0 %v323
        %v613 = vpop.f32.mrf.mxu0
        %v614 = vadd.f32 %v319, %v613
        %615 = vdwg.mxu0
        %v616 = vmul.f32 %v614, 0.2
        %v617 = vmax.f32 %v614, %v616
        %619 = vrot.lane.b32.xlu0 %v617, 112
        %v620 = vpop.permute.xlu0 %619
        %v622 = vadd.f32 %v617, %v620
        %v624 = vsel %vm356, %v622, 0
        %626 = vmatpush.msra.mxu0 0.0
        %627 = vmatpush.msra.mxu0 0.0
        %628 = vmatpush.msra.mxu0 0.0
        %629 = vmatpush.msra.mxu0 0.0
        %630 = vmatpush.msra.mxu0 0.0
        %631 = vmatpush.msra.mxu0 0.0
        %632 = vmatpush.msra.mxu0 0.0
        %633 = vmatpush.msra.mxu0 0.0
        %634 = vmatpush.msra.mxu0 0.0
        %635 = vmatpush.msra.mxu0 0.0
        %636 = vmatpush.msra.mxu0 0.0
        %637 = vmatpush.msra.mxu0 0.0
        %638 = vmatpush.msra.mxu0 0.0
        %639 = vmatpush.msra.mxu0 0.0
        %640 = vmatpush.msra.mxu0 %v314
        %641 = vmatpush.msra.mxu0 %v313
        %642 = vmatmul.f32.gmra.mxu0 %v624
        %v643 = vpop.f32.mrf.mxu0
        %v644 = vadd.f32 0.0, %v643
        %645 = vdwg.mxu0
        %v646 = vld [vmem:[%s308] sm:$0xff]
        %v647 = vmul.f32 %v381, %v646
        %v648 = vmul.f32 %v383, %v644
        %650 = vrot.lane.b32.xlu0 %v648, 32
        %v651 = vpop.permute.xlu0 %650
        %v653 = vadd.f32 %v647, %v651
        %vm654 = vcmask 326912
        %655 = vst.msk [vmem:[%s291] sm:$0xff] %vm654, %v653
        %v656 = vld [vmem:[%s300 + $0x4] sm:$0xf]
        %658 = vst [vmem:[#allocation1] ss:$2 sm:$0xff] %v656
        %v659 = vld.sshfl [vmem:[#allocation1] sm:$0xff pattern:$0x75316420]
        %660 = vrot.lane.b32.xlu0 %v659, 96
        %v661 = vpop.permute.xlu0 %660
        %v662 = vsel %vm325, %v661, 0
        %664 = vmatpush.msra.mxu0 0.0
        %665 = vmatpush.msra.mxu0 0.0
        %666 = vmatpush.msra.mxu0 0.0
        %667 = vmatpush.msra.mxu0 0.0
        %668 = vmatpush.msra.mxu0 0.0
        %669 = vmatpush.msra.mxu0 0.0
        %670 = vmatpush.msra.mxu0 0.0
        %671 = vmatpush.msra.mxu0 0.0
        %672 = vmatpush.msra.mxu0 0.0
        %673 = vmatpush.msra.mxu0 0.0
        %674 = vmatpush.msra.mxu0 0.0
        %675 = vmatpush.msra.mxu0 0.0
        %676 = vmatpush.msra.mxu0 0.0
        %677 = vmatpush.msra.mxu0 0.0
        %678 = vmatpush.msra.mxu0 0.0
        %679 = vmatpush.msra.mxu0 %v662
        %680 = vmatmul.f32.gmra.mxu0 %v323
        %v681 = vpop.f32.mrf.mxu0
        %v682 = vadd.f32 %v319, %v681
        %683 = vdwg.mxu0
        %v684 = vmul.f32 %v682, 0.2
        %v685 = vmax.f32 %v682, %v684
        %687 = vrot.lane.b32.xlu0 %v685, 112
        %v688 = vpop.permute.xlu0 %687
        %v690 = vadd.f32 %v685, %v688
        %v692 = vsel %vm356, %v690, 0
        %694 = vmatpush.msra.mxu0 0.0
        %695 = vmatpush.msra.mxu0 0.0
        %696 = vmatpush.msra.mxu0 0.0
        %697 = vmatpush.msra.mxu0 0.0
        %698 = vmatpush.msra.mxu0 0.0
        %699 = vmatpush.msra.mxu0 0.0
        %700 = vmatpush.msra.mxu0 0.0
        %701 = vmatpush.msra.mxu0 0.0
        %702 = vmatpush.msra.mxu0 0.0
        %703 = vmatpush.msra.mxu0 0.0
        %704 = vmatpush.msra.mxu0 0.0
        %705 = vmatpush.msra.mxu0 0.0
        %706 = vmatpush.msra.mxu0 0.0
        %707 = vmatpush.msra.mxu0 0.0
        %708 = vmatpush.msra.mxu0 %v314
        %709 = vmatpush.msra.mxu0 %v313
        %710 = vmatmul.f32.gmra.mxu0 %v692
        %v711 = vpop.f32.mrf.mxu0
        %v712 = vadd.f32 0.0, %v711
        %713 = vdwg.mxu0
        %v714 = vld [vmem:[%s308] sm:$0xff]
        %v715 = vmul.f32 %v381, %v714
        %v716 = vmul.f32 %v383, %v712
        %718 = vrot.lane.b32.xlu0 %v716, 40
        %v719 = vpop.permute.xlu0 %718
        %v721 = vadd.f32 %v715, %v719
        %vm722 = vcmask 392512
        %723 = vst.msk [vmem:[%s291] sm:$0xff] %vm722, %v721
        %v724 = vld [vmem:[%s300 + $0x4] sm:$0xf]
        %726 = vst [vmem:[#allocation1] ss:$2 sm:$0xff] %v724
        %v727 = vld.sshfl [vmem:[#allocation1] sm:$0xff pattern:$0x75316420]
        %728 = vrot.lane.b32.xlu0 %v727, 64
        %v729 = vpop.permute.xlu0 %728
        %v730 = vsel %vm325, %v729, 0
        %732 = vmatpush.msra.mxu0 0.0
        %733 = vmatpush.msra.mxu0 0.0
        %734 = vmatpush.msra.mxu0 0.0
        %735 = vmatpush.msra.mxu0 0.0
        %736 = vmatpush.msra.mxu0 0.0
        %737 = vmatpush.msra.mxu0 0.0
        %738 = vmatpush.msra.mxu0 0.0
        %739 = vmatpush.msra.mxu0 0.0
        %740 = vmatpush.msra.mxu0 0.0
        %741 = vmatpush.msra.mxu0 0.0
        %742 = vmatpush.msra.mxu0 0.0
        %743 = vmatpush.msra.mxu0 0.0
        %744 = vmatpush.msra.mxu0 0.0
        %745 = vmatpush.msra.mxu0 0.0
        %746 = vmatpush.msra.mxu0 0.0
        %747 = vmatpush.msra.mxu0 %v730
        %748 = vmatmul.f32.gmra.mxu0 %v323
        %v749 = vpop.f32.mrf.mxu0
        %v750 = vadd.f32 %v319, %v749
        %751 = vdwg.mxu0
        %v752 = vmul.f32 %v750, 0.2
        %v753 = vmax.f32 %v750, %v752
        %755 = vrot.lane.b32.xlu0 %v753, 112
        %v756 = vpop.permute.xlu0 %755
        %v758 = vadd.f32 %v753, %v756
        %v760 = vsel %vm356, %v758, 0
        %762 = vmatpush.msra.mxu0 0.0
        %763 = vmatpush.msra.mxu0 0.0
        %764 = vmatpush.msra.mxu0 0.0
        %765 = vmatpush.msra.mxu0 0.0
        %766 = vmatpush.msra.mxu0 0.0
        %767 = vmatpush.msra.mxu0 0.0
        %768 = vmatpush.msra.mxu0 0.0
        %769 = vmatpush.msra.mxu0 0.0
        %770 = vmatpush.msra.mxu0 0.0
        %771 = vmatpush.msra.mxu0 0.0
        %772 = vmatpush.msra.mxu0 0.0
        %773 = vmatpush.msra.mxu0 0.0
        %774 = vmatpush.msra.mxu0 0.0
        %775 = vmatpush.msra.mxu0 0.0
        %776 = vmatpush.msra.mxu0 %v314
        %777 = vmatpush.msra.mxu0 %v313
        %778 = vmatmul.f32.gmra.mxu0 %v760
        %v779 = vpop.f32.mrf.mxu0
        %v780 = vadd.f32 0.0, %v779
        %781 = vdwg.mxu0
        %v782 = vld [vmem:[%s308] sm:$0xff]
        %v783 = vmul.f32 %v381, %v782
        %v784 = vmul.f32 %v383, %v780
        %786 = vrot.lane.b32.xlu0 %v784, 48
        %v787 = vpop.permute.xlu0 %786
        %v789 = vadd.f32 %v783, %v787
        %vm790 = vcmask 458112
        %791 = vst.msk [vmem:[%s291] sm:$0xff] %vm790, %v789
        %v792 = vld [vmem:[%s300 + $0x4] sm:$0xf]
        %794 = vst [vmem:[#allocation1] ss:$2 sm:$0xff] %v792
        %v795 = vld.sshfl [vmem:[#allocation1] sm:$0xff pattern:$0x75316420]
        %796 = vrot.lane.b32.xlu0 %v795, 32
        %v797 = vpop.permute.xlu0 %796
        %v798 = vsel %vm325, %v797, 0
        %800 = vmatpush.msra.mxu0 0.0
        %801 = vmatpush.msra.mxu0 0.0
        %802 = vmatpush.msra.mxu0 0.0
        %803 = vmatpush.msra.mxu0 0.0
        %804 = vmatpush.msra.mxu0 0.0
        %805 = vmatpush.msra.mxu0 0.0
        %806 = vmatpush.msra.mxu0 0.0
        %807 = vmatpush.msra.mxu0 0.0
        %808 = vmatpush.msra.mxu0 0.0
        %809 = vmatpush.msra.mxu0 0.0
        %810 = vmatpush.msra.mxu0 0.0
        %811 = vmatpush.msra.mxu0 0.0
        %812 = vmatpush.msra.mxu0 0.0
        %813 = vmatpush.msra.mxu0 0.0
        %814 = vmatpush.msra.mxu0 0.0
        %815 = vmatpush.msra.mxu0 %v798
        %816 = vmatmul.f32.gmra.mxu0 %v323
        %v817 = vpop.f32.mrf.mxu0
        %v818 = vadd.f32 %v319, %v817
        %819 = vdwg.mxu0
        %v820 = vmul.f32 %v818, 0.2
        %v821 = vmax.f32 %v818, %v820
        %823 = vrot.lane.b32.xlu0 %v821, 112
        %v824 = vpop.permute.xlu0 %823
        %v826 = vadd.f32 %v821, %v824
        %v828 = vsel %vm356, %v826, 0
        %830 = vmatpush.msra.mxu0 0.0
        %831 = vmatpush.msra.mxu0 0.0
        %832 = vmatpush.msra.mxu0 0.0
        %833 = vmatpush.msra.mxu0 0.0
        %834 = vmatpush.msra.mxu0 0.0
        %835 = vmatpush.msra.mxu0 0.0
        %836 = vmatpush.msra.mxu0 0.0
        %837 = vmatpush.msra.mxu0 0.0
        %838 = vmatpush.msra.mxu0 0.0
        %839 = vmatpush.msra.mxu0 0.0
        %840 = vmatpush.msra.mxu0 0.0
        %841 = vmatpush.msra.mxu0 0.0
        %842 = vmatpush.msra.mxu0 0.0
        %843 = vmatpush.msra.mxu0 0.0
        %844 = vmatpush.msra.mxu0 %v314
        %845 = vmatpush.msra.mxu0 %v313
        %846 = vmatmul.f32.gmra.mxu0 %v828
        %v847 = vpop.f32.mrf.mxu0
        %v848 = vadd.f32 0.0, %v847
        %849 = vdwg.mxu0
        %v850 = vld [vmem:[%s308] sm:$0xff]
        %v851 = vmul.f32 %v381, %v850
        %v852 = vmul.f32 %v383, %v848
        %854 = vrot.lane.b32.xlu0 %v852, 56
        %v855 = vpop.permute.xlu0 %854
        %v857 = vadd.f32 %v851, %v855
        %vm858 = vcmask 523712
        %859 = vst.msk [vmem:[%s291] sm:$0xff] %vm858, %v857
        %s860 = sand.u32 %s183, 1
        %s861 = scalar_lea.sflag [#allocation4], %s860
        %s862 = sand.u32 %s183, 1
        %s863 = smul.addr %s862, 8
        %s864 = scalar_lea.vmem [#allocation3], %s863
        // Predicated region
        $region45: #{tpu_custom_call.1} parent=43 // pred_check
          %p865 = pneg %p193
        $region46: #{tpu_custom_call.1} parent=43 // pred_check_branch
          %867 = sbr.rel (%p865) target = $region48
        $region47: #{tpu_custom_call.1} parent=43 // pred_region
          %869 = vsyncadd %s861, 0
          %s870 = sadd.s32 %s26, %s25
          %s871 = smul.addr %s870, 8
          %s872 = scalar_lea.hbm %s6, %s871
          %s874 = sshll.u32 %s864, 4
          %s875 = int_to_ptr.vmem [resolvable:$true] %s874
          %s876 = sshll.u32 %s872, 4
          %s877 = int_to_ptr.hbm [resolvable:$true] %s876
          %879 = dma.vmem_to_hbm [thread:$0]  %s875, 128, %s877, %s861
        $region48: #{tpu_custom_call.1} parent=43 // pred_fallthru
          _
      $region44: #{tpu_custom_call.1} parent=5 // pred_fallthru
        _
      %p880 = scmp.le.s32.totalorder 2, %s16
      // Predicated region
      $region49: #{tpu_custom_call.1} parent=5 // pred_check
        %p881 = pneg %p880
      $region50: #{tpu_custom_call.1} parent=5 // pred_check_branch
        %883 = sbr.rel (%p881) target = $region52
      $region51: #{tpu_custom_call.1} parent=5 // pred_region
        %s884 = ssub.s32 %s16, 2
        // Predicated region
        $region53: #{tpu_custom_call.1} parent=51 // pred_check
          %p885 = pneg %p199
        $region54: #{tpu_custom_call.1} parent=51 // pred_check_branch
          %887 = sbr.rel (%p885) target = $region56
        $region55: #{tpu_custom_call.1} parent=51 // pred_region
          %s888 = sand.u32 %s184, 1
          %s889 = scalar_lea.sflag [#allocation4], %s888
          %s890 = sand.u32 %s184, 1
          %s891 = smul.addr %s890, 8
          %s892 = scalar_lea.vmem [#allocation3], %s891
          %894 = dma.done %s889, 128
        $region56: #{tpu_custom_call.1} parent=51 // pred_fallthru
          _
      $region52: #{tpu_custom_call.1} parent=5 // pred_fallthru
        _
    $region6: #{tpu_custom_call.1} parent=1 // loop_footer
      %s20 = sadd.s32 1, %s16
    $region7: #{tpu_custom_call.1} parent=1 // loop_footer_branch
      %15 = sbr.rel target = $region3
    $region8: #{tpu_custom_call.1} parent=1 // loop_exit
      _
    %895 = vsyncpa [#allocation4], 1
    %s896 = scalar_lea.sflag [#allocation4], 1
    %897 = vsyncpa %s896, 1

</llo_original>
